<compile_context>
chip_gen: v7x
topology: tpu7x:2x2x1
jax: 0.10.0
libtpu: 0.0.40
codegen_flags: <defaults>
</compile_context>

<pallas_src>
import math
import functools

import jax
import jax.numpy as jnp
from jax import lax
from jax.experimental import pallas as pl
from jax.experimental.pallas import tpu as pltpu

_MIB = 1024 * 1024


def _tpu_vmem_bytes():
    try:
        return int(pltpu.get_tpu_info().vmem_capacity_bytes)
    except Exception:
        return 64 * _MIB  # conservative (v7x-sized) fallback


def _pick_tile(extent, candidates):
    for t in candidates:
        if t <= extent and extent % t == 0:
            return t
    return extent  # full extent is always a legal block


# ---------------------------------------------------------------------------
# Kernels
# ---------------------------------------------------------------------------
def qkv_proj_kernel(x_ref, w_ref, b_ref, o_ref):
    # x_ref: (1, TQ, C) bf16; w_ref: (C, TN) bf16; b_ref: (1, TN) f32; o_ref: (1, TQ, TN)
    acc = jnp.dot(x_ref[0], w_ref[...], preferred_element_type=jnp.float32)
    o_ref[0] = (acc + b_ref[...]).astype(o_ref.dtype)


def attn_kernel(q_ref, k_ref, v_ref, wp_ref, bp_ref, o_ref,
                m_sc, l_sc, y_sc, acc_sc, *, tq, tkv, n_unmasked):
    # q_ref: (1,1,1,tq,hd)  k_ref/v_ref: (1,1,1,tkv,hd)  (bf16, q pre-scaled by 1/sqrt(hd))
    # wp_ref: (hd, C) row-slice of the output projection for this head; bp_ref: (1, C)
    # o_ref: (1, tq, C)
    # scratch: m_sc/l_sc (tq,1) f32, y_sc (tq,hd) f32, acc_sc (tq,C) f32
    qt = pl.program_id(1)
    h = pl.program_id(2)
    kv = pl.program_id(3)
    last_kv = kv == pl.num_programs(3) - 1
    last_h = h == pl.num_programs(2) - 1

    @pl.when(jnp.logical_and(h == 0, kv == 0))
    def _():
        acc_sc[...] = jnp.zeros_like(acc_sc)

    @pl.when(kv == 0)
    def _():
        m_sc[...] = jnp.full(m_sc.shape, -jnp.inf, m_sc.dtype)
        l_sc[...] = jnp.zeros_like(l_sc)
        y_sc[...] = jnp.zeros_like(y_sc)

    q_start = qt * tq
    k_start = kv * tkv
    # Skip kv blocks that lie entirely above the causal diagonal for this q tile.
    needed = k_start <= q_start + tq - 1
    if n_unmasked > 0:
        needed = jnp.logical_or(
            needed, jnp.logical_and(q_start < n_unmasked, k_start < n_unmasked))

    @pl.when(needed)
    def _():
        q = q_ref[0, 0, 0]                      # (tq, hd)
        k = k_ref[0, 0, 0]                      # (tkv, hd)
        v = v_ref[0, 0, 0]                      # (tkv, hd)

        # scores = q @ k^T (q already carries the 1/sqrt(hd) scale via Wq)
        s = lax.dot_general(q, k, (((1,), (1,)), ((), ())),
                            preferred_element_type=jnp.float32)   # (tq, tkv)

        row = q_start + lax.broadcasted_iota(jnp.int32, (tq, tkv), 0)
        col = k_start + lax.broadcasted_iota(jnp.int32, (tq, tkv), 1)
        mask = row >= col
        if n_unmasked > 0:
            mask = mask | ((row < n_unmasked) & (col < n_unmasked))
        s = jnp.where(mask, s, -jnp.inf)

        # online softmax update (kv block 0 always contains the diagonal -> no NaN)
        m_prev = m_sc[...]
        m_new = jnp.maximum(m_prev, jnp.max(s, axis=-1, keepdims=True))
        alpha = jnp.exp(m_prev - m_new)
        p = jnp.exp(s - m_new)
        l_sc[...] = alpha * l_sc[...] + jnp.sum(p, axis=-1, keepdims=True)
        y_sc[...] = alpha * y_sc[...] + jnp.dot(p.astype(v.dtype), v,
                                                preferred_element_type=jnp.float32)
        m_sc[...] = m_new

    @pl.when(last_kv)
    def _():
        # normalize, then fused per-head slice of the output projection
        y = (y_sc[...] * pl.reciprocal(l_sc[...], approx=True)).astype(wp_ref.dtype)
        acc_sc[...] += jnp.dot(y, wp_ref[...], preferred_element_type=jnp.float32)

    @pl.when(jnp.logical_and(last_kv, last_h))
    def _():
        o_ref[0] = (acc_sc[...] + bp_ref[...]).astype(o_ref.dtype)


# ---------------------------------------------------------------------------
# Parameter preparation (one-time, outside the per-call path)
# ---------------------------------------------------------------------------
def prepare_params(params, n_head, compute_dtype=jnp.bfloat16):
    """Fuse q/k/v weights, fold the 1/sqrt(hd) score scale into Wq/bq, cast to bf16."""
    C = params["wq"].shape[0]
    hd = C // n_head
    scale = 1.0 / math.sqrt(hd)
    wqkv = jnp.concatenate(
        [params["wq"] * scale, params["wk"], params["wv"]], axis=1).astype(compute_dtype)
    bqkv = jnp.concatenate(
        [params["bq"] * scale, params["bk"], params["bv"]], axis=1).astype(jnp.float32)
    return {
        "wqkv": wqkv,                                  # (C, 3C) bf16
        "bqkv": bqkv,                                  # (1, 3C) f32
        "wp": params["wp"].astype(compute_dtype),      # (C, C)  bf16
        "bp": params["bp"].astype(jnp.float32),        # (1, C)  f32
    }


# ---------------------------------------------------------------------------
# Wrapper
# ---------------------------------------------------------------------------
def causal_self_attention(x, fused_params, n_head, n_unmasked=0):
    """Returns (y, present) matching the PyTorch module (eval mode, layer_past=None)."""
    B, T, C = x.shape
    hd = C // n_head
    out_dtype = x.dtype
    compute_dtype = fused_params["wqkv"].dtype

    vmem_cap = _tpu_vmem_bytes()
    vmem_limit = int(min(vmem_cap * 3 // 4, 112 * _MIB))   # ~96 MiB on 128-MiB parts, 48 MiB on v7x
    big_vmem = vmem_cap >= 100 * _MIB
    q_tiles = (512, 256, 128) if big_vmem else (256, 128)
    kv_tiles = (512, 256, 128) if big_vmem else (256, 128)

    # ---- fused QKV projection (N-tiled (C, 3C) weight) -----------------------
    wqkv, bqkv = fused_params["wqkv"], fused_params["bqkv"]
    x_c = x.astype(compute_dtype)

    tq1 = _pick_tile(T, q_tiles)
    tn = _pick_tile(3 * C, (1024, 768, 512, 384, 256))
    nb = (3 * C) // tn

    qkv = pl.pallas_call(
        qkv_proj_kernel,
        out_shape=jax.ShapeDtypeStruct((B, T, 3 * C), compute_dtype),
        grid_spec=pltpu.PrefetchScalarGridSpec(
            num_scalar_prefetch=0,
            grid=(B, nb, T // tq1),               # t innermost -> weight DMA elided across q tiles
            in_specs=[pl.BlockSpec((1, tq1, C), lambda b, n, t: (b, t, 0)),
                      pl.BlockSpec((C, tn), lambda b, n, t: (0, n)),
                      pl.BlockSpec((1, tn), lambda b, n, t: (0, n))],
            out_specs=pl.BlockSpec((1, tq1, tn), lambda b, n, t: (b, t, n)),
        ),
        compiler_params=pltpu.CompilerParams(
            dimension_semantics=("parallel", "parallel", "parallel"),
            vmem_limit_bytes=vmem_limit),
        cost_estimate=pl.CostEstimate(
            flops=int(2 * B * T * C * 3 * C),
            transcendentals=0,
            bytes_accessed=int(nb * x_c.size * 2 + wqkv.size * 2 + bqkv.size * 4
                               + B * T * 3 * C * 2)),
    )(x_c, wqkv, bqkv)

    # ---- split heads: ONE transpose of the packed qkv also yields `present` --
    qkv_t = jnp.transpose(qkv.reshape(B, T, 3, n_head, hd), (2, 0, 3, 1, 4))  # (3,B,nh,T,hd)
    present = qkv_t[1:3]                          # (2, B, n_head, T, hd) == stack(k, v)

    # ---- flash-style attention + fused output projection ---------------------
    tq = _pick_tile(T, q_tiles)
    tkv = _pick_tile(T, kv_tiles)
    num_kv = T // tkv

    def kv_block_limit(t):
        lim = (t + 1) * tq - 1                    # last key column needed by this q tile
        if n_unmasked > 0:
            lim = jnp.maximum(lim, jnp.where(t * tq < n_unmasked, n_unmasked - 1, 0))
        return lim // tkv

    def q_map(b, t, h, kv):
        return (0, b, h, t, 0)

    def k_map(b, t, h, kv):
        # clamp fully-masked kv blocks to the last useful one -> pipeline re-uses the
        # resident buffer (no DMA) for grid steps whose compute is skipped in-kernel.
        return (1, b, h, jnp.minimum(kv, kv_block_limit(t)), 0)

    def v_map(b, t, h, kv):
        return (2, b, h, jnp.minimum(kv, kv_block_limit(t)), 0)

    kernel = functools.partial(attn_kernel, tq=tq, tkv=tkv, n_unmasked=n_unmasked)
    itemsize = jnp.dtype(compute_dtype).itemsize
    kv_restream_bytes = int(B * n_head * (T // tq) * T * hd * itemsize)  # causal-halved, 2 tensors
    y = pl.pallas_call(
        kernel,
        out_shape=jax.ShapeDtypeStruct((B, T, C), out_dtype),
        grid_spec=pltpu.PrefetchScalarGridSpec(
            num_scalar_prefetch=0,
            grid=(B, T // tq, n_head, num_kv),    # head & kv are reduction axes
            in_specs=[pl.BlockSpec((1, 1, 1, tq, hd), q_map),
                      pl.BlockSpec((1, 1, 1, tkv, hd), k_map),
                      pl.BlockSpec((1, 1, 1, tkv, hd), v_map),
                      pl.BlockSpec((hd, C), lambda b, t, h, kv: (h, 0)),
                      pl.BlockSpec((1, C), lambda b, t, h, kv: (0, 0))],
            out_specs=pl.BlockSpec((1, tq, C), lambda b, t, h, kv: (b, t, 0)),
            scratch_shapes=[pltpu.VMEM((tq, 1), jnp.float32),
                            pltpu.VMEM((tq, 1), jnp.float32),
                            pltpu.VMEM((tq, hd), jnp.float32),
                            pltpu.VMEM((tq, C), jnp.float32)],
        ),
        compiler_params=pltpu.CompilerParams(
            dimension_semantics=("parallel", "parallel", "arbitrary", "arbitrary"),
            vmem_limit_bytes=vmem_limit),
        cost_estimate=pl.CostEstimate(
            flops=int(2 * B * n_head * T * T * hd + 2 * B * T * C * C),
            transcendentals=int(B * n_head * T * T // 2),
            bytes_accessed=int(B * T * C * itemsize                 # q
                               + kv_restream_bytes                  # k/v re-streaming
                               + B * (T // tq) * C * C * itemsize   # Wp re-fetch per q tile
                               + B * T * C * jnp.dtype(out_dtype).itemsize)),
    )(qkv_t, qkv_t, qkv_t, fused_params["wp"], fused_params["bp"])

    return y, present


# ---------------------------------------------------------------------------
# Pure-JAX reference (mirrors the PyTorch forward, eval mode, layer_past=None)
# ---------------------------------------------------------------------------
def causal_self_attention_reference(x, params, n_head, n_unmasked=0):
    B, T, C = x.shape
    hd = C // n_head
    q = x @ params["wq"] + params["bq"]
    k = x @ params["wk"] + params["bk"]
    v = x @ params["wv"] + params["bv"]
    q = q.reshape(B, T, n_head, hd).transpose(0, 2, 1, 3)
    k = k.reshape(B, T, n_head, hd).transpose(0, 2, 1, 3)
    v = v.reshape(B, T, n_head, hd).transpose(0, 2, 1, 3)
    present = jnp.stack([k, v])
    att = jnp.einsum("bhtd,bhsd->bhts", q, k) / math.sqrt(hd)
    row = jnp.arange(T)[:, None]
    col = jnp.arange(T)[None, :]
    mask = row >= col
    if n_unmasked > 0:
        mask = mask | ((row < n_unmasked) & (col < n_unmasked))
    att = jnp.where(mask, att, -jnp.inf)
    att = jax.nn.softmax(att, axis=-1)
    y = jnp.einsum("bhts,bhsd->bhtd", att, v)
    y = y.transpose(0, 2, 1, 3).reshape(B, T, C)
    y = y @ params["wp"] + params["bp"]
    return y, present


# ---------------------------------------------------------------------------
# Main
# ---------------------------------------------------------------------------
if __name__ == "__main__":
    B, T, C, n_head = 2, 8, 32, 4          # block_size >= T; C % n_head == 0

    key = jax.random.PRNGKey(0)
    keys = jax.random.split(key, 6)

    def w(k, shape):
        return (0.02 * jax.random.normal(k, shape)).astype(jnp.float32)

    params = {
        "wq": w(keys[0], (C, C)), "bq": 0.01 * jnp.ones((1, C), jnp.float32),
        "wk": w(keys[1], (C, C)), "bk": 0.02 * jnp.ones((1, C), jnp.float32),
        "wv": w(keys[2], (C, C)), "bv": 0.03 * jnp.ones((1, C), jnp.float32),
        "wp": w(keys[3], (C, C)), "bp": 0.04 * jnp.ones((1, C), jnp.float32),
    }

    x = jax.random.normal(keys[4], (B, T, C), dtype=jnp.float32)

    fused = prepare_params(params, n_head)

    y, present = causal_self_attention(x, fused, n_head)
    y = jax.block_until_ready(y)
    present = jax.block_until_ready(present)

    y_ref, present_ref = causal_self_attention_reference(x, params, n_head)

    assert y.shape == (B, T, C)
    assert present.shape == (2, B, n_head, T, C // n_head)
    # bf16 matmul operands (f32 accumulation) -> compare with bf16-appropriate tolerances.
    assert jnp.allclose(y.astype(jnp.float32), y_ref, rtol=5e-2, atol=5e-3), \
        "y mismatch vs reference"
    assert jnp.allclose(present.astype(jnp.float32), present_ref, rtol=5e-2, atol=5e-3), \
        "present mismatch"

    print("KERNEL_OK")
</pallas_src>

<mosaic_0001>
module attributes {stable_mosaic.version = 11 : i64} {
  func.func @qkv_proj_kernel(%arg0: i32, %arg1: i32, %arg2: i32, %arg3: memref<1x8x32xbf16, #tpu.memory_space<vmem>>, %arg4: memref<32x96xbf16, #tpu.memory_space<vmem>>, %arg5: memref<1x96xf32, #tpu.memory_space<vmem>>, %arg6: memref<1x8x96xbf16, #tpu.memory_space<vmem>>) attributes {dimension_semantics = [#tpu.dimension_semantics<parallel>, #tpu.dimension_semantics<parallel>, #tpu.dimension_semantics<parallel>], iteration_bounds = array<i64: 2, 1, 1>, scalar_prefetch = 0 : i64, scratch_operands = 0 : i64, tpu.core_type = #tpu.core_type<tc>, window_params = [{transform_indices = @transform_0, window_bounds = array<i64: 1, 8, 32>}, {transform_indices = @transform_1, window_bounds = array<i64: 32, 96>}, {transform_indices = @transform_2, window_bounds = array<i64: 1, 96>}, {transform_indices = @transform_3, window_bounds = array<i64: 1, 8, 96>}]} {
    %c0 = arith.constant 0 : index
    %c0_0 = arith.constant 0 : index
    %c0_1 = arith.constant 0 : index
    %0 = vector.load %arg3[%c0, %c0_0, %c0_1] : memref<1x8x32xbf16, #tpu.memory_space<vmem>>, vector<1x8x32xbf16>
    %1 = vector.shape_cast %0 : vector<1x8x32xbf16> to vector<8x32xbf16>
    %c0_2 = arith.constant 0 : index
    %c0_3 = arith.constant 0 : index
    %2 = vector.load %arg4[%c0_2, %c0_3] : memref<32x96xbf16, #tpu.memory_space<vmem>>, vector<32x96xbf16>
    %cst = arith.constant dense<0.000000e+00> : vector<8x96xf32>
    %3 = tpu.matmul %1, %2, %cst {dimension_numbers = #tpu.dot_dimension_numbers<[1], [0], [0], [1], [0, 0, 1, 1], [], []>} : vector<8x32xbf16>, vector<32x96xbf16>, vector<8x96xf32> -> vector<8x96xf32>
    %c0_4 = arith.constant 0 : index
    %c0_5 = arith.constant 0 : index
    %4 = vector.load %arg5[%c0_4, %c0_5] : memref<1x96xf32, #tpu.memory_space<vmem>>, vector<1x96xf32>
    %5 = vector.broadcast %4 : vector<1x96xf32> to vector<8x96xf32>
    %6 = arith.addf %3, %5 : vector<8x96xf32>
    %7 = arith.truncf %6 : vector<8x96xf32> to vector<8x96xbf16>
    %c0_6 = arith.constant 0 : index
    %c0_7 = arith.constant 0 : index
    %c0_8 = arith.constant 0 : index
    %8 = vector.load %arg6[%c0_6, %c0_7, %c0_8] : memref<1x8x96xbf16, #tpu.memory_space<vmem>>, vector<1x8x96xbf16>
    %9 = vector.shape_cast %8 : vector<1x8x96xbf16> to vector<8x96xbf16>
    %10 = vector.shape_cast %7 : vector<8x96xbf16> to vector<1x8x96xbf16>
    tpu.vector_store %arg6[%c0_6, %c0_7, %c0_8], %10 {strides = array<i32>} : memref<1x8x96xbf16, #tpu.memory_space<vmem>>, vector<1x8x96xbf16>,
    return
  }
  func.func @transform_0(%arg0: i32, %arg1: i32, %arg2: i32) -> (i32, i32, i32) {
    %c0_i32 = arith.constant 0 : i32
    %c0_i32_0 = arith.constant 0 : i32
    return %arg0, %arg2, %c0_i32 : i32, i32, i32
  }
  func.func @transform_1(%arg0: i32, %arg1: i32, %arg2: i32) -> (i32, i32) {
    %c0_i32 = arith.constant 0 : i32
    %c0_i32_0 = arith.constant 0 : i32
    return %c0_i32, %arg1 : i32, i32
  }
  func.func @transform_2(%arg0: i32, %arg1: i32, %arg2: i32) -> (i32, i32) {
    %c0_i32 = arith.constant 0 : i32
    %c0_i32_0 = arith.constant 0 : i32
    return %c0_i32, %arg1 : i32, i32
  }
  func.func @transform_3(%arg0: i32, %arg1: i32, %arg2: i32) -> (i32, i32, i32) {
    %c0_i32 = arith.constant 0 : i32
    return %arg0, %arg2, %arg1 : i32, i32, i32
  }
}

</mosaic_0001>

<llo_original>
// kernel: tpu_custom_call.1
$region0: #{tpu_custom_call.1}
  #allocation0 [shape = 'u32[]', space=smem, size = 0x4, offset = 0x4, fixed_abs, tag = 'smem constant byte address 0x4 - core index']
  #allocation1 [shape = 'u32[144,128]{1,0:T(1,128)}', space=vmem, size = 0x12000, scoped, tag = 'internal scratch']
  %s0 = inlined_call_operand.hbm [shape: bf16[2,8,32], index: 0, kind: input, shape index: {}]
  %s1 = inlined_call_operand.hbm [shape: bf16[32,96], index: 1, kind: input, shape index: {}]
  %s2 = inlined_call_operand.vmem [shape: f32[1,96], index: 2, kind: input, shape index: {}]
  %s3 = inlined_call_operand.hbm [shape: bf16[2,8,96], index: 3, kind: output, shape index: {}]
  %s4 = sld [smem:[#allocation0]]
  $region53: #{tpu_custom_call.1} parent=0
    _
  %s6 = ssub.s32 1, %s4
  %s7 = scalar_select 0, %s6, %s4
  $region1: #{tpu_custom_call.1} parent=0
    #allocation2 [shape = 'u8[4096]{0}', space=vmem, size = 0x1000, scoped, tag = 'input window, operand 0']
    #allocation3 [shape = 's32[2]{0}', space=sflag, size = 0x8, scoped, tag = 'scoped memory for tpu_custom_call.1']
    #allocation4 [shape = 's32[2]{0}', space=sflag, size = 0x8, scoped, tag = 'scoped memory for tpu_custom_call.1']
    #allocation5 [shape = 'u8[8192]{0}', space=vmem, size = 0x2000, scoped, tag = 'input window, operand 1, single buffered']
    #allocation6 [shape = 's32[1]{0}', space=sflag, size = 0x4, scoped, tag = 'scoped memory for tpu_custom_call.1']
    #allocation7 [shape = 'u8[4096]{0}', space=vmem, size = 0x1000, scoped, tag = 'output window, operand 0']
    %8 = vsyncpa [#allocation3], 0
    %s9 = scalar_lea.sflag [#allocation3], 1
    %10 = vsyncpa %s9, 0
    %11 = vsyncpa [#allocation6], 0
    %12 = vsyncpa [#allocation4], 0
    %s13 = scalar_lea.sflag [#allocation4], 1
    %14 = vsyncpa %s13, 0
    loop: start=0, step=1, limit=4
    $region2: #{tpu_custom_call.1} parent=1 // loop_pre_header
      _
    $region3: #{tpu_custom_call.1} parent=1 // loop_header
      %s16 = sphi 0, %s20
      %p17 = scmp.ge.s32.totalorder %s16, 4
      %s23 = sphi 0, %s42
      %s24 = sphi 0, %s38
      %s25 = sphi 0, %s34
      %s26 = sphi 0, %s23
      %s27 = sphi 0, %s24
      %s28 = sphi 0, %s25
      %s29 = sphi 0, %s26
      %s30 = sphi 0, %s27
      %s31 = sphi 0, %s28
      %s47 = sphi 0, %s49
      %s50 = sphi 0, %s47
      %s51 = sphi 0, %s50
      %s67 = sphi 0, %s51
      %s73 = sphi 0, %s75
      %s76 = sphi 0, %s73
      %s77 = sphi 0, %s76
      %s93 = sphi 0, %s77
      %s99 = sphi 0, %s101
      %s102 = sphi 0, %s99
      %s103 = sphi 0, %s102
      %s119 = sphi 0, %s103
      %s129 = sphi 0, %s131
      %s132 = sphi 0, %s129
      %s133 = sphi 0, %s132
      %s149 = sphi 0, %s133
    $region4: #{tpu_custom_call.1} parent=1 // loop_header_branch
      %19 = sbr.rel (%p17) target = $region8
    $region5: #{tpu_custom_call.1} parent=1 // loop_body
      %s21 = ssub.s32 %s16, 1
      %s22 = ssub.s32 %s16, 2
      %s32 = sadd.s32 1, %s25
      %p33 = scmp.ge.s32.totalorder %s32, 1
      %s34 = scalar_select %p33, 0, %s32
      %s35 = sadd.s32 1, %s24
      %s36 = scalar_select %p33, %s35, %s24
      %p37 = scmp.ge.s32.totalorder %s36, 1
      %s38 = scalar_select %p37, 0, %s36
      %s39 = sadd.s32 1, %s23
      %s40 = scalar_select %p37, %s39, %s23
      %p41 = scmp.ge.s32.totalorder %s40, 2
      %s42 = scalar_select %p41, 0, %s40
      %s43 = ssub.s32 %s23, %s42
      %s44 = ssub.s32 %s25, %s34
      %s45 = sor.u32 %s43, %s44
      %p46 = scmp.eq.s32.totalorder %s45, 0
      %s48 = sadd.s32 %s47, 1
      %s49 = scalar_select %p46, %s47, %s48
      %p52 = pneg %p46
      %p53 = scmp.eq.s32.totalorder %s16, 1
      %p54 = por %p52, %p53
      %p55 = scmp.ne.s32.totalorder %s47, %s50
      %p56 = scmp.eq.s32.totalorder %s16, 0
      %p57 = por %p55, %p56
      %p58 = scmp.ne.s32.totalorder %s47, %s50
      %p59 = scmp.eq.s32.totalorder %s21, 1
      %p60 = por %p58, %p59
      %p61 = scmp.ne.s32.totalorder %s50, %s51
      %p62 = scmp.eq.s32.totalorder %s21, 0
      %p63 = por %p61, %p62
      %p64 = scmp.ne.s32.totalorder %s50, %s51
      %p65 = scmp.eq.s32.totalorder %s22, 1
      %p66 = por %p64, %p65
      %p68 = scmp.ne.s32.totalorder %s51, %s67
      %p69 = scmp.eq.s32.totalorder %s22, 0
      %p70 = por %p68, %p69
      %s71 = ssub.s32 %s24, %s38
      %p72 = scmp.eq.s32.totalorder %s71, 0
      %s74 = sadd.s32 %s73, 1
      %s75 = scalar_select %p72, %s73, %s74
      %p78 = pneg %p72
      %p79 = scmp.eq.s32.totalorder %s16, 1
      %p80 = por %p78, %p79
      %p81 = scmp.ne.s32.totalorder %s73, %s76
      %p82 = scmp.eq.s32.totalorder %s16, 0
      %p83 = por %p81, %p82
      %p84 = scmp.ne.s32.totalorder %s73, %s76
      %p85 = scmp.eq.s32.totalorder %s21, 1
      %p86 = por %p84, %p85
      %p87 = scmp.ne.s32.totalorder %s76, %s77
      %p88 = scmp.eq.s32.totalorder %s21, 0
      %p89 = por %p87, %p88
      %p90 = scmp.ne.s32.totalorder %s76, %s77
      %p91 = scmp.eq.s32.totalorder %s22, 1
      %p92 = por %p90, %p91
      %p94 = scmp.ne.s32.totalorder %s77, %s93
      %p95 = scmp.eq.s32.totalorder %s22, 0
      %p96 = por %p94, %p95
      %s97 = ssub.s32 %s24, %s38
      %p98 = scmp.eq.s32.totalorder %s97, 0
      %s100 = sadd.s32 %s99, 1
      %s101 = scalar_select %p98, %s99, %s100
      %p104 = pneg %p98
      %p105 = scmp.eq.s32.totalorder %s16, 1
      %p106 = por %p104, %p105
      %p107 = scmp.ne.s32.totalorder %s99, %s102
      %p108 = scmp.eq.s32.totalorder %s16, 0
      %p109 = por %p107, %p108
      %p110 = scmp.ne.s32.totalorder %s99, %s102
      %p111 = scmp.eq.s32.totalorder %s21, 1
      %p112 = por %p110, %p111
      %p113 = scmp.ne.s32.totalorder %s102, %s103
      %p114 = scmp.eq.s32.totalorder %s21, 0
      %p115 = por %p113, %p114
      %p116 = scmp.ne.s32.totalorder %s102, %s103
      %p117 = scmp.eq.s32.totalorder %s22, 1
      %p118 = por %p116, %p117
      %p120 = scmp.ne.s32.totalorder %s103, %s119
      %p121 = scmp.eq.s32.totalorder %s22, 0
      %p122 = por %p120, %p121
      %s123 = ssub.s32 %s23, %s42
      %s124 = ssub.s32 %s25, %s34
      %s125 = sor.u32 %s123, %s124
      %s126 = ssub.s32 %s24, %s38
      %s127 = sor.u32 %s125, %s126
      %p128 = scmp.eq.s32.totalorder %s127, 0
      %s130 = sadd.s32 %s129, 1
      %s131 = scalar_select %p128, %s129, %s130
      %p134 = pneg %p128
      %p135 = scmp.eq.s32.totalorder %s16, 1
      %p136 = por %p134, %p135
      %p137 = scmp.ne.s32.totalorder %s129, %s132
      %p138 = scmp.eq.s32.totalorder %s16, 0
      %p139 = por %p137, %p138
      %p140 = scmp.ne.s32.totalorder %s129, %s132
      %p141 = scmp.eq.s32.totalorder %s21, 1
      %p142 = por %p140, %p141
      %p143 = scmp.ne.s32.totalorder %s132, %s133
      %p144 = scmp.eq.s32.totalorder %s21, 0
      %p145 = por %p143, %p144
      %p146 = scmp.ne.s32.totalorder %s132, %s133
      %p147 = scmp.eq.s32.totalorder %s22, 1
      %p148 = por %p146, %p147
      %p150 = scmp.ne.s32.totalorder %s133, %s149
      %p151 = scmp.eq.s32.totalorder %s22, 0
      %p152 = por %p150, %p151
      %p153 = scmp.le.s32.totalorder 1, %s16
      %p154 = scmp.lt.s32.totalorder %s16, 3
      %p155 = pnand %p153, %p154
      %p156 = pneg %p155
      // Predicated region
      $region9: #{tpu_custom_call.1} parent=5 // pred_check
        _
      $region10: #{tpu_custom_call.1} parent=5 // pred_check_branch
        %158 = sbr.rel (%p155) target = $region12
      $region11: #{tpu_custom_call.1} parent=5 // pred_region
        %s159 = ssub.s32 %s16, 1
        // Predicated region
        $region13: #{tpu_custom_call.1} parent=11 // pred_check
          %p160 = pneg %p89
        $region14: #{tpu_custom_call.1} parent=11 // pred_check_branch
          %162 = sbr.rel (%p160) target = $region16
        $region15: #{tpu_custom_call.1} parent=11 // pred_region
          %s164 = ssub.s32 256, 256
          %165 = vsyncadd [#allocation6], %s164
          %s166 = smul.addr %s27, 64
          %s167 = scalar_lea.hbm %s1, %s166
          %s168 = sshll.u32 [#allocation5], 4
          %s169 = int_to_ptr.vmem [resolvable:$true] %s168
          %174 = dma.hbm_to_vmem [thread:$0]  %s167, 256, %s169, [#allocation6], 64, 64, 4
        $region16: #{tpu_custom_call.1} parent=11 // pred_fallthru
          _
        // Predicated region
        $region17: #{tpu_custom_call.1} parent=11 // pred_check
          %p175 = pneg %p115
        $region18: #{tpu_custom_call.1} parent=11 // pred_check_branch
          %177 = sbr.rel (%p175) target = $region20
        $region19: #{tpu_custom_call.1} parent=11 // pred_region
          %p178 = scmp.lt.s32.totalorder %s27, 0
          %s179 = scalar_select %p178, %s27, 0
          %s180 = scalar_lea.vmem %s2, %s179
        $region20: #{tpu_custom_call.1} parent=11 // pred_fallthru
          _
      $region12: #{tpu_custom_call.1} parent=5 // pred_fallthru
        _
      %p181 = scmp.lt.s32.totalorder %s16, 2
      // Predicated region
      $region21: #{tpu_custom_call.1} parent=5 // pred_check
        %p182 = pneg %p181
      $region22: #{tpu_custom_call.1} parent=5 // pred_check_branch
        %184 = sbr.rel (%p182) target = $region24
      $region23: #{tpu_custom_call.1} parent=5 // pred_region
        // Predicated region
        $region25: #{tpu_custom_call.1} parent=23 // pred_check
          %p185 = pneg %p57
        $region26: #{tpu_custom_call.1} parent=23 // pred_check_branch
          %187 = sbr.rel (%p185) target = $region28
        $region27: #{tpu_custom_call.1} parent=23 // pred_region
          %s188 = sand.u32 %s47, 1
          %s189 = scalar_lea.sflag [#allocation3], %s188
          %s190 = sand.u32 %s47, 1
          %s191 = smul.addr %s190, 4
          %s192 = scalar_lea.vmem [#allocation2], %s191
          %s194 = ssub.s32 64, 64
          %195 = vsyncadd %s189, %s194
          %s196 = sadd.s32 %s25, %s23
          %s197 = smul.addr %s196, 64
          %s198 = scalar_lea.hbm %s0, %s197
          %s200 = sshll.u32 %s192, 4
          %s201 = int_to_ptr.vmem [resolvable:$true] %s200
          %203 = dma.hbm_to_vmem [thread:$0]  %s198, 64, %s201, %s189
        $region28: #{tpu_custom_call.1} parent=23 // pred_fallthru
          _
      $region24: #{tpu_custom_call.1} parent=5 // pred_fallthru
        _
      %p204 = scmp.le.s32.totalorder 1, %s16
      %p205 = scmp.lt.s32.totalorder %s16, 3
      %p206 = pnand %p204, %p205
      %p207 = pneg %p206
      // Predicated region
      $region29: #{tpu_custom_call.1} parent=5 // pred_check
        _
      $region30: #{tpu_custom_call.1} parent=5 // pred_check_branch
        %209 = sbr.rel (%p206) target = $region32
      $region31: #{tpu_custom_call.1} parent=5 // pred_region
        %s210 = ssub.s32 %s16, 1
        %s211 = sand.u32 %s50, 1
        %s212 = scalar_lea.sflag [#allocation3], %s211
        %s213 = sand.u32 %s50, 1
        %s214 = smul.addr %s213, 4
        %s215 = scalar_lea.vmem [#allocation2], %s214
        // Predicated region
        $region33: #{tpu_custom_call.1} parent=31 // pred_check
          %p216 = pneg %p63
        $region34: #{tpu_custom_call.1} parent=31 // pred_check_branch
          %218 = sbr.rel (%p216) target = $region36
        $region35: #{tpu_custom_call.1} parent=31 // pred_region
          %219 = dma.done %s212, 64
        $region36: #{tpu_custom_call.1} parent=31 // pred_fallthru
          _
        // Predicated region
        $region37: #{tpu_custom_call.1} parent=31 // pred_check
          %p220 = pneg %p89
        $region38: #{tpu_custom_call.1} parent=31 // pred_check_branch
          %222 = sbr.rel (%p220) target = $region40
        $region39: #{tpu_custom_call.1} parent=31 // pred_region
          %223 = dma.done [#allocation6], 256
        $region40: #{tpu_custom_call.1} parent=31 // pred_fallthru
          _
        %s224 = sand.u32 %s50, 1
        %s225 = scalar_lea.sflag [#allocation3], %s224
        %s226 = sand.u32 %s50, 1
        %s227 = smul.addr %s226, 4
        %s228 = scalar_lea.vmem [#allocation2], %s227
        %p229 = pneg %p63
        %p230 = pneg %p60
        %p231 = pneg %p89
        %p232 = pneg %p86
        %p233 = scmp.lt.s32.totalorder %s27, 0
        %s234 = scalar_select %p233, %s27, 0
        %s235 = scalar_lea.vmem %s2, %s234
        %p236 = pneg %p115
        %p237 = pneg %p112
        %p238 = pneg %p145
        %p239 = pneg %p142
        %s240 = sand.u32 %s132, 1
        %s241 = scalar_lea.sflag [#allocation4], %s240
        %s242 = sand.u32 %s132, 1
        %s243 = smul.addr %s242, 4
        %s244 = scalar_lea.vmem [#allocation7], %s243
        %p245 = scmp.lt.s32.totalorder %s27, 0
        %s246 = scalar_select %p245, %s27, 0
        %s247 = scalar_lea.vmem %s2, %s246
        %v249 = vld [vmem:[%s215] sm:$0xf]
        %v250 = vld [vmem:[#allocation5] sm:$0xf]
        %v251 = vld [vmem:[#allocation5 + $0x4] sm:$0xf]
        %v252 = vld [vmem:[#allocation5 + $0x8] sm:$0xf]
        %v253 = vld [vmem:[#allocation5 + $0xc] sm:$0xf]
        %v254 = vld [vmem:[%s247] sm:$0x1]
        %v256 = vlaneseq
        %v257 = vshrl.u32 %v256, 7
        %v258 = vsub.s32 0, %v257
        %v259 = vrot.slane %v254, %v258
        %v265 = vunpack.c.l.b16 %v250
        %v266 = vunpack.c.l.b16 %v251
        %v267 = vunpack.c.l.b16 %v252
        %v268 = vunpack.c.l.b16 %v253
        %v269 = vpack.c.b16 %v266, %v265
        %v270 = vpack.c.b16 %v268, %v267
        %vm273 = vcmask 261120
        %v275 = vsel %vm273, %v249, 0
        %277 = vmatprep.subr.bf16.mxu0 0
        %278 = vmatpush1.bf16.msra.mxu0 %v269
        %279 = vmatprep.subr.bf16.mxu0 0
        %280 = vmatpush1.bf16.msra.mxu0 %v270
        %281 = vmatprep.subr.bf16.mxu0 0
        %282 = vmatpush1.bf16.msra.mxu0 0
        %283 = vmatprep.subr.bf16.mxu0 0
        %284 = vmatpush1.bf16.msra.mxu0 0
        %285 = vmatprep.subr.bf16.mxu0 0
        %286 = vmatpush1.bf16.msra.mxu0 0
        %287 = vmatprep.subr.bf16.mxu0 0
        %288 = vmatpush1.bf16.msra.mxu0 0
        %289 = vmatprep.subr.bf16.mxu0 0
        %290 = vmatpush1.bf16.msra.mxu0 0
        %291 = vmatprep.subr.bf16.mxu0 0
        %292 = vmatpush1.bf16.msra.mxu0 0
        %293 = vmatprep.subr.bf16.mxu0 0
        %294 = vmatpush1.bf16.msra.mxu0 0
        %295 = vmatprep.subr.bf16.mxu0 0
        %296 = vmatpush1.bf16.msra.mxu0 0
        %297 = vmatprep.subr.bf16.mxu0 0
        %298 = vmatpush1.bf16.msra.mxu0 0
        %299 = vmatprep.subr.bf16.mxu0 0
        %300 = vmatpush1.bf16.msra.mxu0 0
        %301 = vmatprep.subr.bf16.mxu0 0
        %302 = vmatpush1.bf16.msra.mxu0 0
        %303 = vmatprep.subr.bf16.mxu0 0
        %304 = vmatpush1.bf16.msra.mxu0 0
        %305 = vmatprep.subr.bf16.mxu0 0
        %306 = vmatpush1.bf16.msra.mxu0 0
        %307 = vmatprep.subr.bf16.mxu0 0
        %308 = vmatpush1.bf16.msra.mxu0 0
        %309 = vmatprep.mubr.bf16.mxu0 0
        %310 = vmatmul.mubr.bf16.gmra.mrb[0].mxu0 %v275
        %v311 = vpop.f32.mrb[0].mxu0
        %v312 = vadd.f32 %v259, %v311
        %v313 = vpop.f32.mrb[0].mxu0
        %v314 = vpop.f32.mrb[0].mxu0
        %v315 = vpop.f32.mrb[0].mxu0
        %316 = vdwg.mxu0
        %v317 = vpack.c.bf16 %v312, %v312
        %vm318 = vcmask 781312
        %319 = vst.msk [vmem:[%s244] sm:$0xf] %vm318, %v317
        %s320 = sand.u32 %s132, 1
        %s321 = scalar_lea.sflag [#allocation4], %s320
        %s322 = sand.u32 %s132, 1
        %s323 = smul.addr %s322, 4
        %s324 = scalar_lea.vmem [#allocation7], %s323
        // Predicated region
        $region41: #{tpu_custom_call.1} parent=31 // pred_check
          %p325 = pneg %p142
        $region42: #{tpu_custom_call.1} parent=31 // pred_check_branch
          %327 = sbr.rel (%p325) target = $region44
        $region43: #{tpu_custom_call.1} parent=31 // pred_region
          %s329 = ssub.s32 64, 64
          %330 = vsyncadd %s321, %s329
          %s331 = sadd.s32 %s27, %s28
          %s332 = sadd.s32 %s331, %s26
          %s333 = smul.addr %s332, 64
          %s334 = scalar_lea.hbm %s3, %s333
          %s336 = sshll.u32 %s324, 4
          %s337 = int_to_ptr.vmem [resolvable:$true] %s336
          %339 = dma.vmem_to_hbm [thread:$0]  %s337, 64, %s334, %s321
        $region44: #{tpu_custom_call.1} parent=31 // pred_fallthru
          _
      $region32: #{tpu_custom_call.1} parent=5 // pred_fallthru
        _
      %p340 = scmp.le.s32.totalorder 2, %s16
      // Predicated region
      $region45: #{tpu_custom_call.1} parent=5 // pred_check
        %p341 = pneg %p340
      $region46: #{tpu_custom_call.1} parent=5 // pred_check_branch
        %343 = sbr.rel (%p341) target = $region48
      $region47: #{tpu_custom_call.1} parent=5 // pred_region
        %s344 = ssub.s32 %s16, 2
        // Predicated region
        $region49: #{tpu_custom_call.1} parent=47 // pred_check
          %p345 = pneg %p148
        $region50: #{tpu_custom_call.1} parent=47 // pred_check_branch
          %347 = sbr.rel (%p345) target = $region52
        $region51: #{tpu_custom_call.1} parent=47 // pred_region
          %s348 = sand.u32 %s133, 1
          %s349 = scalar_lea.sflag [#allocation4], %s348
          %s350 = sand.u32 %s133, 1
          %s351 = smul.addr %s350, 4
          %s352 = scalar_lea.vmem [#allocation7], %s351
          %353 = dma.done %s349, 64
        $region52: #{tpu_custom_call.1} parent=47 // pred_fallthru
          _
      $region48: #{tpu_custom_call.1} parent=5 // pred_fallthru
        _
    $region6: #{tpu_custom_call.1} parent=1 // loop_footer
      %s20 = sadd.s32 1, %s16
    $region7: #{tpu_custom_call.1} parent=1 // loop_footer_branch
      %15 = sbr.rel target = $region3
    $region8: #{tpu_custom_call.1} parent=1 // loop_exit
      _
    %354 = vsyncpa [#allocation3], 1
    %s355 = scalar_lea.sflag [#allocation3], 1
    %356 = vsyncpa %s355, 1
    %357 = vsyncpa [#allocation6], 1
    %358 = vsyncpa [#allocation4], 1
    %s359 = scalar_lea.sflag [#allocation4], 1
    %360 = vsyncpa %s359, 1

</llo_original>
